<compile_context>
chip_gen: v7x
topology: tpu7x:2x2x1
jax: 0.10.0
libtpu: 0.0.40
codegen_flags: <defaults>
</compile_context>

<pallas_src>
import functools

import jax
import jax.numpy as jnp
from jax import lax
from jax.experimental import pallas as pl
from jax.experimental.pallas import tpu as pltpu


def _round_up(x, m):
    return (x + m - 1) // m * m


def _lora_embed_kernel(ids_ref, w_hbm, a_hbm, b_t_ref, out_ref,
                       w_rows, a_rows, sem):
    """One token block: gather T rows of W and A^T, delta = A_rows @ (B^T*scale)."""
    T = w_rows.shape[0]
    base = pl.program_id(0) * T

    # Issue all 2*T row copies back-to-back so they are in flight concurrently.
    def issue(t, carry):
        row = ids_ref[base + t]
        pltpu.make_async_copy(w_hbm.at[pl.ds(row, 1), :],
                              w_rows.at[pl.ds(t, 1), :], sem.at[0]).start()
        pltpu.make_async_copy(a_hbm.at[pl.ds(row, 1), :],
                              a_rows.at[pl.ds(t, 1), :], sem.at[1]).start()
        return carry
    lax.fori_loop(0, T, issue, 0, unroll=False)

    # Drain: every copy of a given stream has the same byte count, so waiting
    # T times per stream (with matching descriptors) releases the whole tile.
    def drain(t, carry):
        row = ids_ref[base + t]
        pltpu.make_async_copy(w_hbm.at[pl.ds(row, 1), :],
                              w_rows.at[pl.ds(t, 1), :], sem.at[0]).wait()
        pltpu.make_async_copy(a_hbm.at[pl.ds(row, 1), :],
                              a_rows.at[pl.ds(t, 1), :], sem.at[1]).wait()
        return carry
    lax.fori_loop(0, T, drain, 0, unroll=False)

    # Single [T, r] @ [r, D] matmul per block; scaling is pre-folded into B^T.
    delta = jnp.dot(a_rows[...].astype(jnp.float32),
                    b_t_ref[...].astype(jnp.float32),
                    preferred_element_type=jnp.float32)
    out_ref[...] = (w_rows[...].astype(jnp.float32) + delta).astype(out_ref.dtype)


def prepare_lora_embedding_params(weight, lora_A, lora_B, scaling):
    """Called ONCE when the adapter is loaded (hoisted out of the forward).

    Returns (W [V, D] native dtype, A^T [V, r], B^T*scaling [r, D] f32)."""
    w = jnp.asarray(weight)                                   # no dtype cast
    a_t = jnp.asarray(lora_A).T                               # [V, r]
    b_t_scaled = (jnp.asarray(lora_B).T.astype(jnp.float32) * jnp.float32(scaling))
    return w, a_t, b_t_scaled


def lora_embedding_forward(ids, weight, a_t, b_t_scaled, *,
                           block_tokens=128, out_dtype=None):
    """ids: [...,] int ids; weight: [V, D]; a_t: [V, r]; b_t_scaled: [r, D]."""
    ids_shape = ids.shape
    N = 1
    for s in ids_shape:
        N *= int(s)
    V, D = weight.shape
    r = a_t.shape[1]
    out_dtype = weight.dtype if out_dtype is None else out_dtype

    # Token block size: multiple of 16 (sublane-safe for f32 and bf16), capped
    # by the (padded) number of tokens so tiny inputs do not over-gather.
    T = min(_round_up(block_tokens, 16), _round_up(N, 16))
    num_blocks = pl.cdiv(N, T)
    N_pad = num_blocks * T

    # PyTorch raises on out-of-range ids; a gather kernel would read arbitrary
    # rows, so clamp defensively.  Pad to a whole number of blocks with row 0.
    ids_flat = jnp.clip(ids.reshape(N).astype(jnp.int32), 0, V - 1)
    if N_pad > N:
        ids_flat = jnp.pad(ids_flat, (0, N_pad - N))

    # Explicit VMEM budget (review: v7x has 64 MiB physical / 32 MiB scoped).
    w_b = jnp.dtype(weight.dtype).itemsize
    a_b = jnp.dtype(a_t.dtype).itemsize
    b_b = jnp.dtype(b_t_scaled.dtype).itemsize
    o_b = jnp.dtype(out_dtype).itemsize
    budget = (T * D * w_b + T * r * a_b        # gather scratch
              + 2 * r * D * b_b                # resident B^T (double-buffered)
              + 2 * T * D * o_b)               # double-buffered output blocks
    vmem_limit = int(min(100 * 2**20, max(8 * 2**20, 2 * budget)))

    grid_spec = pltpu.PrefetchScalarGridSpec(
        num_scalar_prefetch=1,                 # ids_flat -> SMEM
        grid=(num_blocks,),
        in_specs=[
            pl.BlockSpec(memory_space=pl.ANY),                 # W (HBM, manual gather)
            pl.BlockSpec(memory_space=pl.ANY),                 # A^T (HBM, manual gather)
            pl.BlockSpec((r, D), lambda i, ids: (0, 0)),       # B^T*scale, VMEM resident
        ],
        out_specs=pl.BlockSpec((T, D), lambda i, ids: (i, 0)),
        scratch_shapes=[
            pltpu.VMEM((T, D), weight.dtype),                  # gathered W rows
            pltpu.VMEM((T, r), a_t.dtype),                     # gathered A^T rows
            pltpu.SemaphoreType.DMA((2,)),                     # [W-stream, A-stream]
        ],
    )

    out = pl.pallas_call(
        _lora_embed_kernel,
        out_shape=jax.ShapeDtypeStruct((N_pad, D), out_dtype),
        grid_spec=grid_spec,
        compiler_params=pltpu.CompilerParams(
            dimension_semantics=("parallel",),   # token blocks are independent
            vmem_limit_bytes=vmem_limit,
        ),
    )(ids_flat, weight, a_t, b_t_scaled)

    return out[:N].reshape(*ids_shape, D)


if __name__ == "__main__":
    # Small shapes implied by the module: nn.Embedding(V, D) base + LoRA rank r.
    B, S = 2, 8          # batch, sequence of token ids
    V, D = 32, 128       # num_embeddings, embedding_dim
    r = 8
    lora_alpha = 1
    scaling = lora_alpha / r

    key = jax.random.PRNGKey(0)
    k_w, k_a, k_b, k_ids = jax.random.split(key, 4)

    # Base embedding weight ~ N(0, 1) (PyTorch nn.Embedding default init).
    weight = jax.random.normal(k_w, (V, D), dtype=jnp.float32)
    # reset_lora_parameters would zero lora_embedding_A (delta == 0); use
    # nonzero values so the LoRA path is actually exercised.  Shapes match the
    # module exactly: A: [r, V], B: [D, r].
    lora_A = jax.random.normal(k_a, (r, V), dtype=jnp.float32)
    lora_B = jax.random.normal(k_b, (D, r), dtype=jnp.float32)

    ids = jax.random.randint(k_ids, (B, S), 0, V, dtype=jnp.int32)

    # Adapter-load-time preparation (transposes + scaling fold), done once.
    w, a_t, b_t_scaled = prepare_lora_embedding_params(weight, lora_A, lora_B, scaling)

    out = lora_embedding_forward(ids, w, a_t, b_t_scaled)
    out = jax.block_until_ready(out)

    # Pure-JAX reference of the PyTorch forward (full-precision matmul).
    after_a_ref = lora_A.T[ids]                                   # [B, S, r]
    ref_delta = jnp.einsum("bsr,rd->bsd", after_a_ref, lora_B.T,
                           precision=jax.lax.Precision.HIGHEST)
    ref = weight[ids] + ref_delta * scaling

    assert out.shape == (B, S, D)
    assert out.dtype == weight.dtype
    assert jnp.allclose(out, ref, atol=1e-3, rtol=1e-3), "mismatch vs reference"

    print("KERNEL_OK")
</pallas_src>

<mosaic_0001>
module attributes {stable_mosaic.version = 11 : i64} {
  func.func @_lora_embed_kernel(%arg0: i32, %arg1: memref<16xi32, #tpu.memory_space<smem>>, %arg2: memref<32x128xf32, #tpu.memory_space<any>>, %arg3: memref<32x8xf32, #tpu.memory_space<any>>, %arg4: memref<8x128xf32, #tpu.memory_space<vmem>>, %arg5: memref<16x128xf32, #tpu.memory_space<vmem>>, %arg6: memref<16x128xf32, #tpu.memory_space<vmem>>, %arg7: memref<16x8xf32, #tpu.memory_space<vmem>>, %arg8: memref<2x!tpu.dma_semaphore, #tpu.memory_space<semaphore_mem>>) attributes {dimension_semantics = [#tpu.dimension_semantics<parallel>], iteration_bounds = array<i64: 1>, scalar_prefetch = 1 : i64, scratch_operands = 3 : i64, tpu.core_type = #tpu.core_type<tc>, window_params = [{}, {}, {pipeline_mode = #tpu.pipeline_mode<synchronous>, transform_indices = @transform_2, window_bounds = array<i64: 8, 128>}, {transform_indices = @transform_3, window_bounds = array<i64: 16, 128>}]} {
    %c16_i32 = arith.constant 16 : i32
    %0 = arith.muli %arg0, %c16_i32 : i32
    %c0_i32 = arith.constant 0 : i32
    %c16_i32_0 = arith.constant 16 : i32
    %1 = arith.addi %c0_i32, %c16_i32_0 : i32
    %c1_i32 = arith.constant 1 : i32
    scf.for %arg9 = %c0_i32 to %1 step %c1_i32  : i32 {
      %9 = arith.addi %0, %arg9 : i32
      %10 = arith.index_cast %9 : i32 to index
      %11 = memref.load %arg1[%10] : memref<16xi32, #tpu.memory_space<smem>>
      %c0_i32_13 = arith.constant 0 : i32
      %c0_i32_14 = arith.constant 0 : i32
      %12 = tpu.memref_slice %arg2[%11, %c0_i32_14] : memref<32x128xf32, #tpu.memory_space<any>> -> memref<1x128xf32, #tpu.memory_space<any>>
      %c0_i32_15 = arith.constant 0 : i32
      %13 = tpu.memref_slice %arg6[%arg9, %c0_i32_15] : memref<16x128xf32, #tpu.memory_space<vmem>> -> memref<1x128xf32, #tpu.memory_space<vmem>>
      %14 = tpu.memref_slice %arg8[%c0_i32_13] : memref<2x!tpu.dma_semaphore, #tpu.memory_space<semaphore_mem>> -> memref<1x!tpu.dma_semaphore, #tpu.memory_space<semaphore_mem>>
      %15 = tpu.memref_squeeze %14 : memref<1x!tpu.dma_semaphore, #tpu.memory_space<semaphore_mem>> -> memref<!tpu.dma_semaphore, #tpu.memory_space<semaphore_mem>>
      tpu.enqueue_dma source(%12 : memref<1x128xf32, #tpu.memory_space<any>>) target(%13 : memref<1x128xf32, #tpu.memory_space<vmem>>) target_semaphore(%15 : memref<!tpu.dma_semaphore, #tpu.memory_space<semaphore_mem>>)
      %c1_i32_16 = arith.constant 1 : i32
      %c0_i32_17 = arith.constant 0 : i32
      %16 = tpu.memref_slice %arg3[%11, %c0_i32_17] : memref<32x8xf32, #tpu.memory_space<any>> -> memref<1x8xf32, #tpu.memory_space<any>>
      %c0_i32_18 = arith.constant 0 : i32
      %17 = tpu.memref_slice %arg7[%arg9, %c0_i32_18] : memref<16x8xf32, #tpu.memory_space<vmem>> -> memref<1x8xf32, #tpu.memory_space<vmem>>
      %18 = tpu.memref_slice %arg8[%c1_i32_16] : memref<2x!tpu.dma_semaphore, #tpu.memory_space<semaphore_mem>> -> memref<1x!tpu.dma_semaphore, #tpu.memory_space<semaphore_mem>>
      %19 = tpu.memref_squeeze %18 : memref<1x!tpu.dma_semaphore, #tpu.memory_space<semaphore_mem>> -> memref<!tpu.dma_semaphore, #tpu.memory_space<semaphore_mem>>
      tpu.enqueue_dma source(%16 : memref<1x8xf32, #tpu.memory_space<any>>) target(%17 : memref<1x8xf32, #tpu.memory_space<vmem>>) target_semaphore(%19 : memref<!tpu.dma_semaphore, #tpu.memory_space<semaphore_mem>>)
    }
    %c16_i32_1 = arith.constant 16 : i32
    %c0_i32_2 = arith.constant 0 : i32
    %c16_i32_3 = arith.constant 16 : i32
    %2 = arith.addi %c0_i32_2, %c16_i32_3 : i32
    %c1_i32_4 = arith.constant 1 : i32
    scf.for %arg9 = %c0_i32_2 to %2 step %c1_i32_4  : i32 {
      %9 = arith.addi %0, %arg9 : i32
      %10 = arith.index_cast %9 : i32 to index
      %11 = memref.load %arg1[%10] : memref<16xi32, #tpu.memory_space<smem>>
      %c0_i32_13 = arith.constant 0 : i32
      %c0_i32_14 = arith.constant 0 : i32
      %12 = tpu.memref_slice %arg2[%11, %c0_i32_14] : memref<32x128xf32, #tpu.memory_space<any>> -> memref<1x128xf32, #tpu.memory_space<any>>
      %c0_i32_15 = arith.constant 0 : i32
      %13 = tpu.memref_slice %arg6[%arg9, %c0_i32_15] : memref<16x128xf32, #tpu.memory_space<vmem>> -> memref<1x128xf32, #tpu.memory_space<vmem>>
      %14 = tpu.memref_slice %arg8[%c0_i32_13] : memref<2x!tpu.dma_semaphore, #tpu.memory_space<semaphore_mem>> -> memref<1x!tpu.dma_semaphore, #tpu.memory_space<semaphore_mem>>
      %15 = tpu.memref_squeeze %14 : memref<1x!tpu.dma_semaphore, #tpu.memory_space<semaphore_mem>> -> memref<!tpu.dma_semaphore, #tpu.memory_space<semaphore_mem>>
      tpu.wait_dma2 semaphore(%15 : memref<!tpu.dma_semaphore, #tpu.memory_space<semaphore_mem>>) src(%12 : memref<1x128xf32, #tpu.memory_space<any>>) dst(%13 : memref<1x128xf32, #tpu.memory_space<vmem>>)
      %c1_i32_16 = arith.constant 1 : i32
      %c0_i32_17 = arith.constant 0 : i32
      %16 = tpu.memref_slice %arg3[%11, %c0_i32_17] : memref<32x8xf32, #tpu.memory_space<any>> -> memref<1x8xf32, #tpu.memory_space<any>>
      %c0_i32_18 = arith.constant 0 : i32
      %17 = tpu.memref_slice %arg7[%arg9, %c0_i32_18] : memref<16x8xf32, #tpu.memory_space<vmem>> -> memref<1x8xf32, #tpu.memory_space<vmem>>
      %18 = tpu.memref_slice %arg8[%c1_i32_16] : memref<2x!tpu.dma_semaphore, #tpu.memory_space<semaphore_mem>> -> memref<1x!tpu.dma_semaphore, #tpu.memory_space<semaphore_mem>>
      %19 = tpu.memref_squeeze %18 : memref<1x!tpu.dma_semaphore, #tpu.memory_space<semaphore_mem>> -> memref<!tpu.dma_semaphore, #tpu.memory_space<semaphore_mem>>
      tpu.wait_dma2 semaphore(%19 : memref<!tpu.dma_semaphore, #tpu.memory_space<semaphore_mem>>) src(%16 : memref<1x8xf32, #tpu.memory_space<any>>) dst(%17 : memref<1x8xf32, #tpu.memory_space<vmem>>)
    }
    %c16_i32_5 = arith.constant 16 : i32
    %c0 = arith.constant 0 : index
    %c0_6 = arith.constant 0 : index
    %3 = vector.load %arg7[%c0, %c0_6] : memref<16x8xf32, #tpu.memory_space<vmem>>, vector<16x8xf32>
    %c0_7 = arith.constant 0 : index
    %c0_8 = arith.constant 0 : index
    %4 = vector.load %arg4[%c0_7, %c0_8] : memref<8x128xf32, #tpu.memory_space<vmem>>, vector<8x128xf32>
    %cst = arith.constant dense<0.000000e+00> : vector<16x128xf32>
    %5 = tpu.matmul %3, %4, %cst {dimension_numbers = #tpu.dot_dimension_numbers<[1], [0], [0], [1], [0, 0, 1, 1], [], []>} : vector<16x8xf32>, vector<8x128xf32>, vector<16x128xf32> -> vector<16x128xf32>
    %c0_9 = arith.constant 0 : index
    %c0_10 = arith.constant 0 : index
    %6 = vector.load %arg6[%c0_9, %c0_10] : memref<16x128xf32, #tpu.memory_space<vmem>>, vector<16x128xf32>
    %7 = arith.addf %6, %5 : vector<16x128xf32>
    %c0_11 = arith.constant 0 : index
    %c0_12 = arith.constant 0 : index
    %8 = vector.load %arg5[%c0_11, %c0_12] : memref<16x128xf32, #tpu.memory_space<vmem>>, vector<16x128xf32>
    tpu.vector_store %arg5[%c0_11, %c0_12], %7 {strides = array<i32>} : memref<16x128xf32, #tpu.memory_space<vmem>>, vector<16x128xf32>,
    return
  }
  func.func @transform_2(%arg0: i32, %arg1: memref<16xi32, #tpu.memory_space<smem>>) -> (i32, i32) {
    %c0_i32 = arith.constant 0 : i32
    %c0_i32_0 = arith.constant 0 : i32
    %c0_i32_1 = arith.constant 0 : i32
    return %c0_i32, %c0_i32_0 : i32, i32
  }
  func.func @transform_3(%arg0: i32, %arg1: memref<16xi32, #tpu.memory_space<smem>>) -> (i32, i32) {
    %c0_i32 = arith.constant 0 : i32
    %c0_i32_0 = arith.constant 0 : i32
    return %arg0, %c0_i32 : i32, i32
  }
}

</mosaic_0001>

<llo_original>
// kernel: tpu_custom_call.1
$region0: #{tpu_custom_call.1}
  #allocation0 [shape = 'u32[]', space=smem, size = 0x4, offset = 0x4, fixed_abs, tag = 'smem constant byte address 0x4 - core index']
  #allocation1 [shape = 'u32[144,128]{1,0:T(1,128)}', space=vmem, size = 0x12000, scoped, tag = 'internal scratch']
  #allocation2 [shape = 'f32[16,128]{1,0:T(8,128)}', space=vmem, size = 0x2000, scoped, tag = 'scratch operand']
  #allocation3 [shape = 'f32[16,8]{1,0:T(8,128)}', space=vmem, size = 0x2000, scoped, tag = 'scratch operand']
  #allocation4 [shape = 's32[2]{0}', space=sflag, size = 0x8, scoped, tag = 'scratch operand']
  #allocation5 [shape = 's32[1]{0}', space=sflag, size = 0x4, scoped, tag = 'scoped memory for tpu_custom_call.1']
  #allocation6 [shape = 'u8[512]{0}', space=smem, size = 0x200, scoped, tag = 'prefetched SMEM operand 0']
  #allocation9 [shape = 's32[]', space=sflag, size = 0x4, offset = 0, fixed_abs, tag = 'sflag constant byte address 0x0 - dummy sync flag']
  #allocation10 [shape = 's32[]', space=sflag, size = 0x4, offset = 0, fixed_abs, tag = 'sflag constant byte address 0x0 - dummy sync flag']
  %s0 = inlined_call_operand.vmem [shape: s32[16], index: 0, kind: input, shape index: {}]
  %s1 = inlined_call_operand.vmem [shape: f32[32,128], index: 1, kind: input, shape index: {}]
  %s2 = inlined_call_operand.vmem [shape: f32[32,8], index: 2, kind: input, shape index: {}]
  %s3 = inlined_call_operand.vmem [shape: f32[8,128], index: 3, kind: input, shape index: {}]
  %s4 = inlined_call_operand.hbm [shape: f32[16,128], index: 4, kind: output, shape index: {}]
  %s5 = sld [smem:[#allocation0]]
  $region88: #{tpu_custom_call.1} parent=0
    _
  %s7 = ssub.s32 1, %s5
  %s8 = scalar_select 0, %s7, %s5
  %s9 = sshll.u32 %s0, 4
  %s10 = int_to_ptr.vmem [resolvable:$true] %s9
  %12 = dma.vmem_to_smem %s10, 16, [#allocation6], [#allocation5]
  %13 = dma.done [#allocation5], 16
  %14 = sfence
  $region1: #{tpu_custom_call.1} parent=0
    #allocation7 [shape = 'u8[8192]{0}', space=vmem, size = 0x2000, scoped, tag = 'output window, operand 0, single buffered']
    #allocation8 [shape = 's32[1]{0}', space=sflag, size = 0x4, scoped, tag = 'scoped memory for tpu_custom_call.1']
    %15 = vsyncpa [#allocation8], 0
    // Predicated region
    $region2: #{tpu_custom_call.1} parent=1 // pred_check
      _
    $region3: #{tpu_custom_call.1} parent=1 // pred_check_branch
      %17 = sbr.rel (0) target = $region5
    $region4: #{tpu_custom_call.1} parent=1 // pred_region
      _
    $region5: #{tpu_custom_call.1} parent=1 // pred_fallthru
      _
    %s18 = smul.u32 0, 16
    loop: start=0, step=1, limit=16
    $region6: #{tpu_custom_call.1} parent=1 // loop_pre_header
      _
    $region7: #{tpu_custom_call.1} parent=1 // loop_header
      %s20 = sphi 0, %s24
      %p21 = scmp.ge.s32.totalorder %s20, 16
    $region8: #{tpu_custom_call.1} parent=1 // loop_header_branch
      %23 = sbr.rel (%p21) target = $region12
    $region9: #{tpu_custom_call.1} parent=1 // loop_body
      %s25 = sadd.s32 %s18, %s20
      %s26 = sld [smem:[#allocation6 + %s25]]
      %s27 = scalar_lea.vmem %s1, %s26
      %s28 = scalar_lea.vmem [#allocation2], %s20
      %p30 = scmp.lt.u32.totalorder 1, 8
      %p31 = pneg %p30
      // Predicated region
      $region13: #{tpu_custom_call.1} parent=9 // pred_check
        _
      $region14: #{tpu_custom_call.1} parent=9 // pred_check_branch
        %33 = sbr.rel (%p30) target = $region16
      $region15: #{tpu_custom_call.1} parent=9 // pred_region
        %s48 = sand.u32 1, 7
        %p49 = scmp.eq.s32.totalorder %s48, 0
        %p50 = pneg %p49
        // Predicated region
        $region28: #{tpu_custom_call.1} parent=15 // pred_check
          _
        $region29: #{tpu_custom_call.1} parent=15 // pred_check_branch
          %52 = sbr.rel (%p49) target = $region31
        $region30: #{tpu_custom_call.1} parent=15 // pred_region
          %s53 = sand.u32 1, 7
          %s54 = ssub.s32 1, %s53
          %s55 = scalar_lea.vmem %s27, %s54
          %s56 = ssub.s32 1, %s53
          %s57 = scalar_lea.vmem %s28, %s56 [#allocation2]
          %s58 = sshllo.u32 0, %s53
          loop: start=0, step=1, limit=1
          $region32: #{tpu_custom_call.1} parent=30 // loop_pre_header
            _
          $region33: #{tpu_custom_call.1} parent=30 // loop_header
            %s60 = sphi 0, %s64
            %p61 = scmp.ge.s32.totalorder %s60, 1
            %s65 = sphi %s55, %s55
            %s66 = sphi %s57, %s57
          $region34: #{tpu_custom_call.1} parent=30 // loop_header_branch
            %63 = sbr.rel (%p61) target = $region38
          $region35: #{tpu_custom_call.1} parent=30 // loop_body
            %v67 = vld [vmem:[%s65] sm:%s58]
            %68 = vst [vmem:[%s66] sm:%s58] %v67
          $region36: #{tpu_custom_call.1} parent=30 // loop_footer
            %s64 = sadd.s32 1, %s60
          $region37: #{tpu_custom_call.1} parent=30 // loop_footer_branch
            %59 = sbr.rel target = $region33
          $region38: #{tpu_custom_call.1} parent=30 // loop_exit
            _
        $region31: #{tpu_custom_call.1} parent=15 // pred_fallthru
          _
      $region16: #{tpu_custom_call.1} parent=9 // pred_fallthru
        _
      // Predicated region
      $region17: #{tpu_custom_call.1} parent=9 // pred_check
        %p34 = pneg %p30
      $region18: #{tpu_custom_call.1} parent=9 // pred_check_branch
        %36 = sbr.rel (%p34) target = $region20
      $region19: #{tpu_custom_call.1} parent=9 // pred_region
        %s37 = sshllo.u32 0, 1
        loop: start=0, step=1, limit=1
        $region21: #{tpu_custom_call.1} parent=19 // loop_pre_header
          _
        $region22: #{tpu_custom_call.1} parent=19 // loop_header
          %s39 = sphi 0, %s43
          %p40 = scmp.ge.s32.totalorder %s39, 1
          %s44 = sphi %s27, %s27
          %s45 = sphi %s28, %s28
        $region23: #{tpu_custom_call.1} parent=19 // loop_header_branch
          %42 = sbr.rel (%p40) target = $region27
        $region24: #{tpu_custom_call.1} parent=19 // loop_body
          %v46 = vld [vmem:[%s44] sm:%s37]
          %47 = vst [vmem:[%s45] sm:%s37] %v46
        $region25: #{tpu_custom_call.1} parent=19 // loop_footer
          %s43 = sadd.s32 1, %s39
        $region26: #{tpu_custom_call.1} parent=19 // loop_footer_branch
          %38 = sbr.rel target = $region22
        $region27: #{tpu_custom_call.1} parent=19 // loop_exit
          _
      $region20: #{tpu_custom_call.1} parent=9 // pred_fallthru
        _
      // Predicated region
      $region39: #{tpu_custom_call.1} parent=9 // pred_check
        _
      $region40: #{tpu_custom_call.1} parent=9 // pred_check_branch
        %71 = sbr.rel (0) target = $region42
      $region41: #{tpu_custom_call.1} parent=9 // pred_region
        %72 = vsyncadd [#allocation4], 16
      $region42: #{tpu_custom_call.1} parent=9 // pred_fallthru
        _
      %s73 = scalar_lea.vmem %s2, %s26
      %s74 = scalar_lea.vmem [#allocation3], %s20
      %s75 = scalar_lea.sflag [#allocation4], 1
      %p77 = scmp.lt.u32.totalorder 1, 8
      %p78 = pneg %p77
      // Predicated region
      $region43: #{tpu_custom_call.1} parent=9 // pred_check
        _
      $region44: #{tpu_custom_call.1} parent=9 // pred_check_branch
        %80 = sbr.rel (%p77) target = $region46
      $region45: #{tpu_custom_call.1} parent=9 // pred_region
        %s95 = sand.u32 1, 7
        %p96 = scmp.eq.s32.totalorder %s95, 0
        %p97 = pneg %p96
        // Predicated region
        $region58: #{tpu_custom_call.1} parent=45 // pred_check
          _
        $region59: #{tpu_custom_call.1} parent=45 // pred_check_branch
          %99 = sbr.rel (%p96) target = $region61
        $region60: #{tpu_custom_call.1} parent=45 // pred_region
          %s100 = sand.u32 1, 7
          %s101 = ssub.s32 1, %s100
          %s102 = scalar_lea.vmem %s73, %s101
          %s103 = ssub.s32 1, %s100
          %s104 = scalar_lea.vmem %s74, %s103 [#allocation3]
          %s105 = sshllo.u32 0, %s100
          loop: start=0, step=1, limit=1
          $region62: #{tpu_custom_call.1} parent=60 // loop_pre_header
            _
          $region63: #{tpu_custom_call.1} parent=60 // loop_header
            %s107 = sphi 0, %s111
            %p108 = scmp.ge.s32.totalorder %s107, 1
            %s112 = sphi %s102, %s102
            %s113 = sphi %s104, %s104
          $region64: #{tpu_custom_call.1} parent=60 // loop_header_branch
            %110 = sbr.rel (%p108) target = $region68
          $region65: #{tpu_custom_call.1} parent=60 // loop_body
            %v114 = vld [vmem:[%s112] sm:%s105]
            %115 = vst [vmem:[%s113] sm:%s105] %v114
          $region66: #{tpu_custom_call.1} parent=60 // loop_footer
            %s111 = sadd.s32 1, %s107
          $region67: #{tpu_custom_call.1} parent=60 // loop_footer_branch
            %106 = sbr.rel target = $region63
          $region68: #{tpu_custom_call.1} parent=60 // loop_exit
            _
        $region61: #{tpu_custom_call.1} parent=45 // pred_fallthru
          _
      $region46: #{tpu_custom_call.1} parent=9 // pred_fallthru
        _
      // Predicated region
      $region47: #{tpu_custom_call.1} parent=9 // pred_check
        %p81 = pneg %p77
      $region48: #{tpu_custom_call.1} parent=9 // pred_check_branch
        %83 = sbr.rel (%p81) target = $region50
      $region49: #{tpu_custom_call.1} parent=9 // pred_region
        %s84 = sshllo.u32 0, 1
        loop: start=0, step=1, limit=1
        $region51: #{tpu_custom_call.1} parent=49 // loop_pre_header
          _
        $region52: #{tpu_custom_call.1} parent=49 // loop_header
          %s86 = sphi 0, %s90
          %p87 = scmp.ge.s32.totalorder %s86, 1
          %s91 = sphi %s73, %s73
          %s92 = sphi %s74, %s74
        $region53: #{tpu_custom_call.1} parent=49 // loop_header_branch
          %89 = sbr.rel (%p87) target = $region57
        $region54: #{tpu_custom_call.1} parent=49 // loop_body
          %v93 = vld [vmem:[%s91] sm:%s84]
          %94 = vst [vmem:[%s92] sm:%s84] %v93
        $region55: #{tpu_custom_call.1} parent=49 // loop_footer
          %s90 = sadd.s32 1, %s86
        $region56: #{tpu_custom_call.1} parent=49 // loop_footer_branch
          %85 = sbr.rel target = $region52
        $region57: #{tpu_custom_call.1} parent=49 // loop_exit
          _
      $region50: #{tpu_custom_call.1} parent=9 // pred_fallthru
        _
      // Predicated region
      $region69: #{tpu_custom_call.1} parent=9 // pred_check
        _
      $region70: #{tpu_custom_call.1} parent=9 // pred_check_branch
        %118 = sbr.rel (0) target = $region72
      $region71: #{tpu_custom_call.1} parent=9 // pred_region
        %119 = vsyncadd %s75, 16
      $region72: #{tpu_custom_call.1} parent=9 // pred_fallthru
        _
    $region10: #{tpu_custom_call.1} parent=1 // loop_footer
      %s24 = sadd.s32 1, %s20
    $region11: #{tpu_custom_call.1} parent=1 // loop_footer_branch
      %19 = sbr.rel target = $region7
    $region12: #{tpu_custom_call.1} parent=1 // loop_exit
      _
    loop: start=0, step=1, limit=16
    $region73: #{tpu_custom_call.1} parent=1 // loop_pre_header
      _
    $region74: #{tpu_custom_call.1} parent=1 // loop_header
      %s121 = sphi 0, %s125
      %p122 = scmp.ge.s32.totalorder %s121, 16
    $region75: #{tpu_custom_call.1} parent=1 // loop_header_branch
      %124 = sbr.rel (%p122) target = $region79
    $region76: #{tpu_custom_call.1} parent=1 // loop_body
      %s126 = sadd.s32 %s18, %s121
      %s127 = sld [smem:[#allocation6 + %s126]]
      %s128 = smul.u32 1, 1
      %s129 = sshll.u32 %s128, 4
      %130 = dma.done [#allocation4], %s129
      %s131 = scalar_lea.sflag [#allocation4], 1
      %s132 = sshll.u32 %s128, 4
      %133 = dma.done %s131, %s132
    $region77: #{tpu_custom_call.1} parent=1 // loop_footer
      %s125 = sadd.s32 1, %s121
    $region78: #{tpu_custom_call.1} parent=1 // loop_footer_branch
      %120 = sbr.rel target = $region74
    $region79: #{tpu_custom_call.1} parent=1 // loop_exit
      _
    %v134 = vld [vmem:[#allocation3] sm:$0xff]
    %v135 = vld [vmem:[#allocation3 + $0x8] sm:$0xff]
    %v136 = vld [vmem:[%s3] sm:$0xff]
    %vm137 = vcmask 64512
    %v139 = vsel %vm137, %v134, 0
    %v142 = vsel %vm137, %v135, 0
    %144 = vmatprep.subr.mxu0 0.0
    %145 = vmatpush1.msra.mxu0 %v136
    %146 = vmatprep.subr.mxu0 0.0
    %147 = vmatpush1.msra.mxu0 0.0
    %148 = vmatprep.subr.mxu0 0.0
    %149 = vmatpush1.msra.mxu0 0.0
    %150 = vmatprep.subr.mxu0 0.0
    %151 = vmatpush1.msra.mxu0 0.0
    %152 = vmatprep.subr.mxu0 0.0
    %153 = vmatpush1.msra.mxu0 0.0
    %154 = vmatprep.subr.mxu0 0.0
    %155 = vmatpush1.msra.mxu0 0.0
    %156 = vmatprep.subr.mxu0 0.0
    %157 = vmatpush1.msra.mxu0 0.0
    %158 = vmatprep.subr.mxu0 0.0
    %159 = vmatpush1.msra.mxu0 0.0
    %160 = vmatprep.subr.mxu0 0.0
    %161 = vmatpush1.msra.mxu0 0.0
    %162 = vmatprep.subr.mxu0 0.0
    %163 = vmatpush1.msra.mxu0 0.0
    %164 = vmatprep.subr.mxu0 0.0
    %165 = vmatpush1.msra.mxu0 0.0
    %166 = vmatprep.subr.mxu0 0.0
    %167 = vmatpush1.msra.mxu0 0.0
    %168 = vmatprep.subr.mxu0 0.0
    %169 = vmatpush1.msra.mxu0 0.0
    %170 = vmatprep.subr.mxu0 0.0
    %171 = vmatpush1.msra.mxu0 0.0
    %172 = vmatprep.subr.mxu0 0.0
    %173 = vmatpush1.msra.mxu0 0.0
    %174 = vmatprep.subr.mxu0 0.0
    %175 = vmatpush1.msra.mxu0 0.0
    %176 = vmatprep.subr.mxu0 0.0
    %177 = vmatpush1.msra.mxu0 0.0
    %178 = vmatprep.subr.mxu0 0.0
    %179 = vmatpush1.msra.mxu0 0.0
    %180 = vmatprep.subr.mxu0 0.0
    %181 = vmatpush1.msra.mxu0 0.0
    %182 = vmatprep.subr.mxu0 0.0
    %183 = vmatpush1.msra.mxu0 0.0
    %184 = vmatprep.subr.mxu0 0.0
    %185 = vmatpush1.msra.mxu0 0.0
    %186 = vmatprep.subr.mxu0 0.0
    %187 = vmatpush1.msra.mxu0 0.0
    %188 = vmatprep.subr.mxu0 0.0
    %189 = vmatpush1.msra.mxu0 0.0
    %190 = vmatprep.subr.mxu0 0.0
    %191 = vmatpush1.msra.mxu0 0.0
    %192 = vmatprep.subr.mxu0 0.0
    %193 = vmatpush1.msra.mxu0 0.0
    %194 = vmatprep.subr.mxu0 0.0
    %195 = vmatpush1.msra.mxu0 0.0
    %196 = vmatprep.subr.mxu0 0.0
    %197 = vmatpush1.msra.mxu0 0.0
    %198 = vmatprep.subr.mxu0 0.0
    %199 = vmatpush1.msra.mxu0 0.0
    %200 = vmatprep.subr.mxu0 0.0
    %201 = vmatpush1.msra.mxu0 0.0
    %202 = vmatprep.subr.mxu0 0.0
    %203 = vmatpush1.msra.mxu0 0.0
    %204 = vmatprep.subr.mxu0 0.0
    %205 = vmatpush1.msra.mxu0 0.0
    %206 = vmatprep.subr.mxu0 0.0
    %207 = vmatpush1.msra.mxu0 0.0
    %208 = vmatprep.mubr.f32.mxu0 0.0
    %209 = vmatmul.mubr.f32.gmra.mrb[0].mxu0 %v139
    %v210 = vpop.f32.mrb[0].mxu0
    %v211 = vadd.f32 0.0, %v210
    %v212 = vpop.f32.mrb[0].mxu0
    %213 = vmatprep.mubr.f32.mxu0 0.0
    %214 = vmatmul.mubr.f32.gmra.mrb[0].mxu0 %v142
    %v215 = vpop.f32.mrb[0].mxu0
    %v216 = vadd.f32 0.0, %v215
    %v217 = vpop.f32.mrb[0].mxu0
    %218 = vdwg.mxu0
    %v219 = vld [vmem:[#allocation2] sm:$0xff]
    %v220 = vld [vmem:[#allocation2 + $0x8] sm:$0xff]
    %v221 = vadd.f32 %v219, %v211
    %v222 = vadd.f32 %v220, %v216
    %223 = vst [vmem:[#allocation7] sm:$0xff] %v221
    %224 = vst [vmem:[#allocation7 + $0x8] sm:$0xff] %v222
    // Predicated region
    $region80: #{tpu_custom_call.1} parent=1 // pred_check
      _
    $region81: #{tpu_custom_call.1} parent=1 // pred_check_branch
      %226 = sbr.rel (0) target = $region83
    $region82: #{tpu_custom_call.1} parent=1 // pred_region
      %s228 = ssub.s32 256, 256
      %229 = vsyncadd [#allocation8], %s228
      %s230 = sshll.u32 [#allocation7], 4
      %s231 = int_to_ptr.vmem [resolvable:$true] %s230
      %236 = dma.vmem_to_hbm [thread:$0]  %s231, 256, %s4, [#allocation8], 128, 128, 8
    $region83: #{tpu_custom_call.1} parent=1 // pred_fallthru
      _
    // Predicated region
    $region84: #{tpu_custom_call.1} parent=1 // pred_check
      _
    $region85: #{tpu_custom_call.1} parent=1 // pred_check_branch
      %238 = sbr.rel (0) target = $region87
    $region86: #{tpu_custom_call.1} parent=1 // pred_region
      %239 = dma.done [#allocation8], 256
    $region87: #{tpu_custom_call.1} parent=1 // pred_fallthru
      _
    %240 = vsyncpa [#allocation8], 1
  %241 = vsyncmov [#allocation4]
  %s242 = vpop.sfrf %241
  %p243 = scmp.eq.s32.totalorder %s242, 0
  %p244 = pneg %p243
  %246 = shalt.err (%p244)
  %s247 = scalar_lea.sflag [#allocation4], 1
  %248 = vsyncmov %s247
  %s249 = vpop.sfrf %248
  %p250 = scmp.eq.s32.totalorder %s249, 0
  %p251 = pneg %p250
  %253 = shalt.err (%p251)

</llo_original>
